<compile_context>
chip_gen: v7x
topology: tpu7x:2x2x1
jax: 0.10.0
libtpu: 0.0.40
codegen_flags: <defaults>
</compile_context>

<pallas_src>
import jax
import jax.numpy as jnp
from jax.experimental import pallas as pl
from jax.experimental.pallas import tpu as pltpu


# ----------------------------- Kernel 1: GCN conv --------------------------- #
def gcn_conv_kernel(a_ref,      # [tm, tk]  bf16  normalized adjacency tile
                    xw_ref,     # [tk, Dh]  bf16  (X @ Wg) rows for this K tile
                    bg_ref,     # [1, Dh]   f32   bias (resident)
                    scale_ref,  # [tm, Dh]  bf16  inverted-dropout scale (0 or 2)
                    h_ref,      # [tm, Dh]  bf16  output
                    acc_ref):   # [tm, Dh]  f32   scratch accumulator
    k = pl.program_id(1)

    @pl.when(k == 0)
    def _():
        acc_ref[...] = jnp.zeros_like(acc_ref)

    # Pure A @ XW accumulation on the MXU, f32 accumulation.
    acc_ref[...] += jnp.dot(a_ref[...], xw_ref[...],
                            preferred_element_type=jnp.float32)

    @pl.when(k == pl.num_programs(1) - 1)
    def _():
        hrelu = jnp.maximum(acc_ref[...] + bg_ref[...], 0.0)          # bias + ReLU
        h_ref[...] = (hrelu * scale_ref[...].astype(jnp.float32)).astype(h_ref.dtype)


# ------------------ Kernel 2: tiled running-max pool + MLP ------------------- #
def pool_mlp_kernel(h_ref,      # [tn, Dh]   bf16  node features tile
                    ids_ref,    # [1, tn]    int32 graph id per node (sentinel=G for pad)
                    wl_ref,     # [Dh, Dm]   bf16
                    bl_ref,     # [1, Dm]    f32
                    wf_ref,     # [Dm, Do]   bf16
                    bf_ref,     # [1, Do]    f32
                    out_ref,    # [G, Do]    f32
                    acc_ref):   # [G_pad, Dh] f32  running segmented max
    i = pl.program_id(0)
    g_pad, _ = acc_ref.shape
    tn = h_ref.shape[0]

    @pl.when(i == 0)
    def _():
        acc_ref[...] = jnp.full(acc_ref.shape, -1e30, acc_ref.dtype)

    hf = h_ref[...].astype(jnp.float32)                               # [tn, Dh]
    gids = jax.lax.broadcasted_iota(jnp.int32, (g_pad, tn), 0)        # [G_pad, tn]
    maskf = (ids_ref[...] == gids).astype(jnp.float32)                # [G_pad, tn]
    bias = (maskf - 1.0) * 1e30                                       # 0 member / -1e30 other
    tile_max = jnp.max(hf[None, :, :] + bias[:, :, None], axis=1)     # [G_pad, Dh]
    acc_ref[...] = jnp.maximum(acc_ref[...], tile_max)

    @pl.when(i == pl.num_programs(0) - 1)
    def _():
        pooled = acc_ref[...]
        # Padded / empty graph rows stay at -1e30; zero them before the MLP.
        pooled = jnp.where(pooled > -1e29, pooled, 0.0)
        m = jnp.dot(pooled.astype(jnp.bfloat16), wl_ref[...],
                    preferred_element_type=jnp.float32) + bl_ref[...]
        m = jnp.maximum(m, 0.0)
        o = jnp.dot(m.astype(jnp.bfloat16), wf_ref[...],
                    preferred_element_type=jnp.float32) + bf_ref[...]
        out_ref[...] = o[:out_ref.shape[0], :]


# ------------------------- graph-structure precompute ------------------------ #
def build_norm_adj(edge_index, num_nodes):
    """Dense normalized adjacency matching PyG GCNConv(improved=True)."""
    src, dst = edge_index[0], edge_index[1]
    a = jnp.zeros((num_nodes, num_nodes), jnp.float32)
    a = a.at[dst, src].add(1.0)                                  # message j -> i
    a_hat = a + 2.0 * jnp.eye(num_nodes, dtype=jnp.float32)      # improved: weight-2 self loops
    deg = jnp.sum(a_hat, axis=1)
    dinv = jnp.where(deg > 0, 1.0 / jnp.sqrt(deg), 0.0)
    return dinv[:, None] * a_hat * dinv[None, :]                 # D^-1/2 (A + 2I) D^-1/2


def _round_up(x, m):
    return ((x + m - 1) // m) * m


def _plan_tiles(n, tm_target=512, tk_target=2048):
    """Tile plan with tm | tk | n_pad, tm % 8 == 0, tk % 128 == 0."""
    if n >= tk_target:
        tm, tk = tm_target, tk_target
    elif n >= tm_target:
        tm, tk = tm_target, _round_up(n, tm_target)
    else:
        tk = _round_up(n, 128)
        tm = tk
    n_pad = _round_up(n, tk)
    return tm, tk, n_pad


def prepare_graph(a_norm, batch, num_graphs, tm_target=512, tk_target=2048):
    """Pad the (cached) graph structure to the tile plan. Built once, reused."""
    n = a_norm.shape[0]
    tm, tk, n_pad = _plan_tiles(n, tm_target, tk_target)
    a_pad = jnp.zeros((n_pad, n_pad), jnp.bfloat16)
    a_pad = a_pad.at[:n, :n].set(a_norm.astype(jnp.bfloat16))
    # padded nodes get sentinel graph id == num_graphs -> never match any real graph
    batch_pad = jnp.full((1, n_pad), num_graphs, jnp.int32)
    batch_pad = batch_pad.at[0, :n].set(batch.astype(jnp.int32))
    tn = 512 if n_pad % 512 == 0 else tk          # kernel-2 node tile (divides n_pad)
    return {"a": a_pad, "batch": batch_pad, "n": n, "n_pad": n_pad,
            "g": num_graphs, "tm": tm, "tk": tk, "tn": tn}


# --------------------------------- forward ----------------------------------- #
def gcn_model_forward(x, graph, params, dropout_key, training=True):
    n, n_pad, g = graph["n"], graph["n_pad"], graph["g"]
    tm, tk, tn = graph["tm"], graph["tk"], graph["tn"]
    d_h = params["w_g"].shape[1]
    d_m = params["w_l"].shape[1]
    d_out = params["w_f"].shape[1]
    g_pad = _round_up(max(g, 1), 8)

    # Hoisted feature transform (once, f32): XW = X @ Wg.  K=8 would waste the MXU.
    xw = jnp.dot(x, params["w_g"])
    xw_pad = jnp.zeros((n_pad, d_h), jnp.bfloat16).at[:n].set(xw.astype(jnp.bfloat16))

    # Inverted dropout (p=0.5) scale; padded rows scaled to 0 so padded H == 0.
    # TODO(synk): RNG stream differs from torch's; p=0.5 / 2x semantics match.
    if training:
        keep = jax.random.bernoulli(dropout_key, 0.5, (n, d_h))
        scale = (keep.astype(jnp.float32) * 2.0).astype(jnp.bfloat16)
    else:
        scale = jnp.ones((n, d_h), jnp.bfloat16)
    scale_pad = jnp.zeros((n_pad, d_h), jnp.bfloat16).at[:n].set(scale)

    # --- Kernel 1: tiled A_norm @ XW, f32 accumulation, bf16 output ---
    grid1 = (n_pad // tm, n_pad // tk)
    h = pl.pallas_call(
        gcn_conv_kernel,
        out_shape=jax.ShapeDtypeStruct((n_pad, d_h), jnp.bfloat16),
        grid_spec=pltpu.PrefetchScalarGridSpec(
            num_scalar_prefetch=0,
            grid=grid1,
            in_specs=[
                pl.BlockSpec((tm, tk), lambda i, k: (i, k)),     # A tile (dominant stream)
                pl.BlockSpec((tk, d_h), lambda i, k: (k, 0)),    # XW rows for this K tile
                pl.BlockSpec((1, d_h), lambda i, k: (0, 0)),     # bias (resident)
                pl.BlockSpec((tm, d_h), lambda i, k: (i, 0)),    # dropout scale rows
            ],
            out_specs=pl.BlockSpec((tm, d_h), lambda i, k: (i, 0)),
            scratch_shapes=[pltpu.VMEM((tm, d_h), jnp.float32)],
        ),
        compiler_params=pltpu.CompilerParams(
            dimension_semantics=("parallel", "arbitrary"),
            vmem_limit_bytes=32 * 1024 * 1024),
    )(graph["a"], xw_pad, params["b_g"].astype(jnp.float32), scale_pad)

    # --- Kernel 2: tiled running segmented max + Linear -> ReLU -> Linear ---
    grid2 = (n_pad // tn,)
    out = pl.pallas_call(
        pool_mlp_kernel,
        out_shape=jax.ShapeDtypeStruct((g, d_out), jnp.float32),
        grid_spec=pltpu.PrefetchScalarGridSpec(
            num_scalar_prefetch=0,
            grid=grid2,
            in_specs=[
                pl.BlockSpec((tn, d_h), lambda i: (i, 0)),       # H node tile (bf16)
                pl.BlockSpec((1, tn), lambda i: (0, i)),         # graph ids for this tile
                pl.BlockSpec((d_h, d_m), lambda i: (0, 0)),      # W_l (resident)
                pl.BlockSpec((1, d_m), lambda i: (0, 0)),
                pl.BlockSpec((d_m, d_out), lambda i: (0, 0)),    # W_f (resident)
                pl.BlockSpec((1, d_out), lambda i: (0, 0)),
            ],
            out_specs=pl.BlockSpec((g, d_out), lambda i: (0, 0)),
            scratch_shapes=[pltpu.VMEM((g_pad, d_h), jnp.float32)],
        ),
        compiler_params=pltpu.CompilerParams(
            dimension_semantics=("arbitrary",),
            vmem_limit_bytes=32 * 1024 * 1024),
    )(
        h,
        graph["batch"],
        params["w_l"].astype(jnp.bfloat16),
        params["b_l"].astype(jnp.float32),
        params["w_f"].astype(jnp.bfloat16),
        params["b_f"].astype(jnp.float32),
    )
    return out


# ------------------------------ reference (pure JAX) -------------------------- #
def reference_forward(x, a_norm, batch, num_graphs, params, drop_scale):
    h = jnp.maximum(a_norm @ (x @ params["w_g"]) + params["b_g"], 0.0) * drop_scale
    pooled = jax.ops.segment_max(h, batch, num_segments=num_graphs)
    m = jnp.maximum(pooled @ params["w_l"] + params["b_l"], 0.0)
    return m @ params["w_f"] + params["b_f"]


def init_params(key, input_dim, graph_hidden, mlp_hidden, output_dim):
    """Deterministic synthetic parameters (shapes follow GCNModel.__init__)."""
    k = jax.random.split(key, 6)
    dh, dm = graph_hidden[0], mlp_hidden[1]
    assert mlp_hidden[0] == dh  # MLP input must match last graph hidden dim
    scale = 0.1
    return {
        "w_g": scale * jax.random.normal(k[0], (input_dim, dh), jnp.float32),
        "b_g": scale * jax.random.normal(k[1], (1, dh), jnp.float32),
        "w_l": scale * jax.random.normal(k[2], (dh, dm), jnp.float32),
        "b_l": scale * jax.random.normal(k[3], (1, dm), jnp.float32),
        "w_f": scale * jax.random.normal(k[4], (dm, output_dim), jnp.float32),
        "b_f": scale * jax.random.normal(k[5], (1, output_dim), jnp.float32),
    }


# ----------------------------------- main ------------------------------------ #
if __name__ == "__main__":
    key = jax.random.PRNGKey(0)

    # GCNModel(input_dim=8, output_dim=4, graph_hidden_dims=[32],
    #          mlp_hidden_dims=[32, 16], act='relu')
    input_dim, output_dim = 8, 4
    graph_hidden = [32]
    mlp_hidden = [32, 16]

    # Small deterministic batched graph: 16 nodes, 3 graphs (contiguous node ids).
    num_nodes, num_graphs = 16, 3
    batch = jnp.array([0] * 6 + [1] * 5 + [2] * 5, jnp.int32)

    # Bidirectional chain edges within each graph.
    src_list, dst_list = [], []
    for lo, hi in [(0, 6), (6, 11), (11, 16)]:
        for i in range(lo, hi - 1):
            src_list += [i, i + 1]
            dst_list += [i + 1, i]
    edge_index = jnp.array([src_list, dst_list], jnp.int32)   # [2, 26]

    kx, kp, kd = jax.random.split(key, 3)
    x = jax.random.normal(kx, (num_nodes, input_dim), jnp.float32)
    params = init_params(kp, input_dim, graph_hidden, mlp_hidden, output_dim)

    # Graph structure built/padded once and reused across forward calls.
    a_norm = build_norm_adj(edge_index, num_nodes)
    graph = prepare_graph(a_norm, batch, num_graphs)

    # Numerical sanity check of the deterministic path (dropout disabled).
    out_eval = gcn_model_forward(x, graph, params, dropout_key=kd, training=False)
    ref_eval = reference_forward(x, a_norm, batch, num_graphs, params,
                                 jnp.ones((num_nodes, graph_hidden[0]), jnp.float32))
    assert jnp.max(jnp.abs(out_eval - ref_eval)) < 5e-2

    # Real forward (F.dropout is applied in the spec's forward).
    out = gcn_model_forward(x, graph, params, dropout_key=kd, training=True)
    jax.block_until_ready(out)
    assert out.shape == (num_graphs, output_dim)
    print("KERNEL_OK")
</pallas_src>

<mosaic_0001>
module attributes {stable_mosaic.version = 11 : i64} {
  func.func @gcn_conv_kernel(%arg0: i32, %arg1: i32, %arg2: memref<128x128xbf16, #tpu.memory_space<vmem>>, %arg3: memref<128x32xbf16, #tpu.memory_space<vmem>>, %arg4: memref<1x32xf32, #tpu.memory_space<vmem>>, %arg5: memref<128x32xbf16, #tpu.memory_space<vmem>>, %arg6: memref<128x32xbf16, #tpu.memory_space<vmem>>, %arg7: memref<128x32xf32, #tpu.memory_space<vmem>>) attributes {dimension_semantics = [#tpu.dimension_semantics<parallel>, #tpu.dimension_semantics<arbitrary>], iteration_bounds = array<i64: 1, 1>, scalar_prefetch = 0 : i64, scratch_operands = 1 : i64, tpu.core_type = #tpu.core_type<tc>, window_params = [{transform_indices = @transform_0, window_bounds = array<i64: 128, 128>}, {transform_indices = @transform_1, window_bounds = array<i64: 128, 32>}, {pipeline_mode = #tpu.pipeline_mode<synchronous>, transform_indices = @transform_2, window_bounds = array<i64: 1, 32>}, {transform_indices = @transform_3, window_bounds = array<i64: 128, 32>}, {transform_indices = @transform_4, window_bounds = array<i64: 128, 32>}]} {
    %c0_i32 = arith.constant 0 : i32
    %0 = arith.cmpi eq, %arg1, %c0_i32 : i32
    %1 = arith.extui %0 : i1 to i32
    %c0_i32_0 = arith.constant 0 : i32
    %2 = arith.cmpi ne, %1, %c0_i32_0 : i32
    scf.if %2 {
      %cst_10 = arith.constant 0.000000e+00 : f32
      %12 = vector.broadcast %cst_10 : f32 to vector<128x32xf32>
      %c0_11 = arith.constant 0 : index
      %c0_12 = arith.constant 0 : index
      %13 = vector.load %arg7[%c0_11, %c0_12] : memref<128x32xf32, #tpu.memory_space<vmem>>, vector<128x32xf32>
      tpu.vector_store %arg7[%c0_11, %c0_12], %12 {strides = array<i32>} : memref<128x32xf32, #tpu.memory_space<vmem>>, vector<128x32xf32>,
    } else {
    }
    %c0 = arith.constant 0 : index
    %c0_1 = arith.constant 0 : index
    %3 = vector.load %arg7[%c0, %c0_1] : memref<128x32xf32, #tpu.memory_space<vmem>>, vector<128x32xf32>
    %c0_2 = arith.constant 0 : index
    %c0_3 = arith.constant 0 : index
    %4 = vector.load %arg2[%c0_2, %c0_3] : memref<128x128xbf16, #tpu.memory_space<vmem>>, vector<128x128xbf16>
    %c0_4 = arith.constant 0 : index
    %c0_5 = arith.constant 0 : index
    %5 = vector.load %arg3[%c0_4, %c0_5] : memref<128x32xbf16, #tpu.memory_space<vmem>>, vector<128x32xbf16>
    %cst = arith.constant dense<0.000000e+00> : vector<128x32xf32>
    %6 = tpu.matmul %4, %5, %cst {dimension_numbers = #tpu.dot_dimension_numbers<[1], [0], [0], [1], [0, 0, 1, 1], [], []>} : vector<128x128xbf16>, vector<128x32xbf16>, vector<128x32xf32> -> vector<128x32xf32>
    %7 = arith.addf %3, %6 : vector<128x32xf32>
    %c0_6 = arith.constant 0 : index
    %c0_7 = arith.constant 0 : index
    %8 = vector.load %arg7[%c0_6, %c0_7] : memref<128x32xf32, #tpu.memory_space<vmem>>, vector<128x32xf32>
    tpu.vector_store %arg7[%c0_6, %c0_7], %7 {strides = array<i32>} : memref<128x32xf32, #tpu.memory_space<vmem>>, vector<128x32xf32>,
    %c0_i32_8 = arith.constant 0 : i32
    %9 = arith.cmpi eq, %arg1, %c0_i32_8 : i32
    %10 = arith.extui %9 : i1 to i32
    %c0_i32_9 = arith.constant 0 : i32
    %11 = arith.cmpi ne, %10, %c0_i32_9 : i32
    scf.if %11 {
      %c0_10 = arith.constant 0 : index
      %c0_11 = arith.constant 0 : index
      %12 = vector.load %arg7[%c0_10, %c0_11] : memref<128x32xf32, #tpu.memory_space<vmem>>, vector<128x32xf32>
      %c0_12 = arith.constant 0 : index
      %c0_13 = arith.constant 0 : index
      %13 = vector.load %arg4[%c0_12, %c0_13] : memref<1x32xf32, #tpu.memory_space<vmem>>, vector<1x32xf32>
      %14 = vector.broadcast %13 : vector<1x32xf32> to vector<128x32xf32>
      %15 = arith.addf %12, %14 : vector<128x32xf32>
      %cst_14 = arith.constant 0.000000e+00 : f32
      %16 = vector.broadcast %cst_14 : f32 to vector<128x32xf32>
      %17 = arith.maximumf %15, %16 : vector<128x32xf32>
      %c0_15 = arith.constant 0 : index
      %c0_16 = arith.constant 0 : index
      %18 = vector.load %arg5[%c0_15, %c0_16] : memref<128x32xbf16, #tpu.memory_space<vmem>>, vector<128x32xbf16>
      %19 = arith.extf %18 : vector<128x32xbf16> to vector<128x32xf32>
      %20 = arith.mulf %17, %19 : vector<128x32xf32>
      %21 = arith.truncf %20 : vector<128x32xf32> to vector<128x32xbf16>
      %c0_17 = arith.constant 0 : index
      %c0_18 = arith.constant 0 : index
      %22 = vector.load %arg6[%c0_17, %c0_18] : memref<128x32xbf16, #tpu.memory_space<vmem>>, vector<128x32xbf16>
      tpu.vector_store %arg6[%c0_17, %c0_18], %21 {strides = array<i32>} : memref<128x32xbf16, #tpu.memory_space<vmem>>, vector<128x32xbf16>,
    } else {
    }
    return
  }
  func.func @transform_0(%arg0: i32, %arg1: i32) -> (i32, i32) {
    %c0_i32 = arith.constant 0 : i32
    return %arg0, %arg1 : i32, i32
  }
  func.func @transform_1(%arg0: i32, %arg1: i32) -> (i32, i32) {
    %c0_i32 = arith.constant 0 : i32
    %c0_i32_0 = arith.constant 0 : i32
    return %arg1, %c0_i32 : i32, i32
  }
  func.func @transform_2(%arg0: i32, %arg1: i32) -> (i32, i32) {
    %c0_i32 = arith.constant 0 : i32
    %c0_i32_0 = arith.constant 0 : i32
    %c0_i32_1 = arith.constant 0 : i32
    return %c0_i32, %c0_i32_0 : i32, i32
  }
  func.func @transform_3(%arg0: i32, %arg1: i32) -> (i32, i32) {
    %c0_i32 = arith.constant 0 : i32
    %c0_i32_0 = arith.constant 0 : i32
    return %arg0, %c0_i32 : i32, i32
  }
  func.func @transform_4(%arg0: i32, %arg1: i32) -> (i32, i32) {
    %c0_i32 = arith.constant 0 : i32
    %c0_i32_0 = arith.constant 0 : i32
    return %arg0, %c0_i32 : i32, i32
  }
}

</mosaic_0001>

<llo_original>
// kernel: tpu_custom_call.1
$region0: #{tpu_custom_call.1}
  #allocation0 [shape = 'u32[]', space=smem, size = 0x4, offset = 0x4, fixed_abs, tag = 'smem constant byte address 0x4 - core index']
  #allocation1 [shape = 'u32[144,128]{1,0:T(1,128)}', space=vmem, size = 0x12000, scoped, tag = 'internal scratch']
  #allocation2 [shape = 'f32[128,32]{1,0:T(8,128)}', space=vmem, size = 0x10000, scoped, tag = 'scratch operand']
  %s0 = inlined_call_operand.vmem [shape: bf16[128,128], index: 0, kind: input, shape index: {}]
  %s1 = inlined_call_operand.vmem [shape: bf16[128,32], index: 1, kind: input, shape index: {}]
  %s2 = inlined_call_operand.vmem [shape: f32[1,32], index: 2, kind: input, shape index: {}]
  %s3 = inlined_call_operand.vmem [shape: bf16[128,32], index: 3, kind: input, shape index: {}]
  %s4 = inlined_call_operand.vmem [shape: bf16[128,32], index: 4, kind: output, shape index: {}]
  %s5 = sld [smem:[#allocation0]]
  $region34: #{tpu_custom_call.1} parent=0
    _
  %s7 = ssub.s32 1, %s5
  %s8 = scalar_select 0, %s7, %s5
  // Predicated region
  $region2: #{tpu_custom_call.1} parent=0 // pred_check
    _
  $region3: #{tpu_custom_call.1} parent=0 // pred_check_branch
    %10 = sbr.rel (0) target = $region5
  $region4: #{tpu_custom_call.1} parent=0 // pred_region
    _
  $region5: #{tpu_custom_call.1} parent=0 // pred_fallthru
    _
  // Predicated region
  $region6: #{tpu_custom_call.1} parent=0 // pred_check
    _
  $region7: #{tpu_custom_call.1} parent=0 // pred_check_branch
    %12 = sbr.rel (0) target = $region9
  $region8: #{tpu_custom_call.1} parent=0 // pred_region
    _
  $region9: #{tpu_custom_call.1} parent=0 // pred_fallthru
    _
  // Predicated region
  $region10: #{tpu_custom_call.1} parent=0 // pred_check
    _
  $region11: #{tpu_custom_call.1} parent=0 // pred_check_branch
    %14 = sbr.rel (0) target = $region13
  $region12: #{tpu_custom_call.1} parent=0 // pred_region
    _
  $region13: #{tpu_custom_call.1} parent=0 // pred_fallthru
    _
  // Predicated region
  $region14: #{tpu_custom_call.1} parent=0 // pred_check
    _
  $region15: #{tpu_custom_call.1} parent=0 // pred_check_branch
    %16 = sbr.rel (0) target = $region17
  $region16: #{tpu_custom_call.1} parent=0 // pred_region
    _
  $region17: #{tpu_custom_call.1} parent=0 // pred_fallthru
    _
  %p18 = scmp.eq.s32.totalorder 0, 0
  // Predicated region
  $region18: #{tpu_custom_call.1} parent=0 // pred_check
    %p19 = pneg %p18
  $region19: #{tpu_custom_call.1} parent=0 // pred_check_branch
    %21 = sbr.rel (%p19) target = $region21
  $region20: #{tpu_custom_call.1} parent=0 // pred_region
    %vm22 = vcmask 261120
    %23 = vst.msk [vmem:[#allocation2] sm:$0xff] %vm22, 0.0
    %24 = vst.msk [vmem:[#allocation2 + $0x8] sm:$0xff] %vm22, 0.0
    %25 = vst.msk [vmem:[#allocation2 + $0x10] sm:$0xff] %vm22, 0.0
    %26 = vst.msk [vmem:[#allocation2 + $0x18] sm:$0xff] %vm22, 0.0
    %27 = vst.msk [vmem:[#allocation2 + $0x20] sm:$0xff] %vm22, 0.0
    %28 = vst.msk [vmem:[#allocation2 + $0x28] sm:$0xff] %vm22, 0.0
    %29 = vst.msk [vmem:[#allocation2 + $0x30] sm:$0xff] %vm22, 0.0
    %30 = vst.msk [vmem:[#allocation2 + $0x38] sm:$0xff] %vm22, 0.0
    %31 = vst.msk [vmem:[#allocation2 + $0x40] sm:$0xff] %vm22, 0.0
    %32 = vst.msk [vmem:[#allocation2 + $0x48] sm:$0xff] %vm22, 0.0
    %33 = vst.msk [vmem:[#allocation2 + $0x50] sm:$0xff] %vm22, 0.0
    %34 = vst.msk [vmem:[#allocation2 + $0x58] sm:$0xff] %vm22, 0.0
    %35 = vst.msk [vmem:[#allocation2 + $0x60] sm:$0xff] %vm22, 0.0
    %36 = vst.msk [vmem:[#allocation2 + $0x68] sm:$0xff] %vm22, 0.0
    %37 = vst.msk [vmem:[#allocation2 + $0x70] sm:$0xff] %vm22, 0.0
    %38 = vst.msk [vmem:[#allocation2 + $0x78] sm:$0xff] %vm22, 0.0
  $region21: #{tpu_custom_call.1} parent=0 // pred_fallthru
    _
  %v39 = vld [vmem:[#allocation2] sm:$0xff]
  %v40 = vld [vmem:[#allocation2 + $0x8] sm:$0xff]
  %v41 = vld [vmem:[#allocation2 + $0x10] sm:$0xff]
  %v42 = vld [vmem:[#allocation2 + $0x18] sm:$0xff]
  %v43 = vld [vmem:[#allocation2 + $0x20] sm:$0xff]
  %v44 = vld [vmem:[#allocation2 + $0x28] sm:$0xff]
  %v45 = vld [vmem:[#allocation2 + $0x30] sm:$0xff]
  %v46 = vld [vmem:[#allocation2 + $0x38] sm:$0xff]
  %v47 = vld [vmem:[#allocation2 + $0x40] sm:$0xff]
  %v48 = vld [vmem:[#allocation2 + $0x48] sm:$0xff]
  %v49 = vld [vmem:[#allocation2 + $0x50] sm:$0xff]
  %v50 = vld [vmem:[#allocation2 + $0x58] sm:$0xff]
  %v51 = vld [vmem:[#allocation2 + $0x60] sm:$0xff]
  %v52 = vld [vmem:[#allocation2 + $0x68] sm:$0xff]
  %v53 = vld [vmem:[#allocation2 + $0x70] sm:$0xff]
  %v54 = vld [vmem:[#allocation2 + $0x78] sm:$0xff]
  %v55 = vld [vmem:[%s0] sm:$0xf]
  %v56 = vld [vmem:[%s0 + $0x4] sm:$0xf]
  %v57 = vld [vmem:[%s0 + $0x8] sm:$0xf]
  %v58 = vld [vmem:[%s0 + $0xc] sm:$0xf]
  %v59 = vld [vmem:[%s0 + $0x10] sm:$0xf]
  %v60 = vld [vmem:[%s0 + $0x14] sm:$0xf]
  %v61 = vld [vmem:[%s0 + $0x18] sm:$0xf]
  %v62 = vld [vmem:[%s0 + $0x1c] sm:$0xf]
  %v63 = vld [vmem:[%s0 + $0x20] sm:$0xf]
  %v64 = vld [vmem:[%s0 + $0x24] sm:$0xf]
  %v65 = vld [vmem:[%s0 + $0x28] sm:$0xf]
  %v66 = vld [vmem:[%s0 + $0x2c] sm:$0xf]
  %v67 = vld [vmem:[%s0 + $0x30] sm:$0xf]
  %v68 = vld [vmem:[%s0 + $0x34] sm:$0xf]
  %v69 = vld [vmem:[%s0 + $0x38] sm:$0xf]
  %v70 = vld [vmem:[%s0 + $0x3c] sm:$0xf]
  %v71 = vld [vmem:[%s1] sm:$0xf]
  %v72 = vld [vmem:[%s1 + $0x4] sm:$0xf]
  %v73 = vld [vmem:[%s1 + $0x8] sm:$0xf]
  %v74 = vld [vmem:[%s1 + $0xc] sm:$0xf]
  %v75 = vld [vmem:[%s1 + $0x10] sm:$0xf]
  %v76 = vld [vmem:[%s1 + $0x14] sm:$0xf]
  %v77 = vld [vmem:[%s1 + $0x18] sm:$0xf]
  %v78 = vld [vmem:[%s1 + $0x1c] sm:$0xf]
  %v79 = vld [vmem:[%s1 + $0x20] sm:$0xf]
  %v80 = vld [vmem:[%s1 + $0x24] sm:$0xf]
  %v81 = vld [vmem:[%s1 + $0x28] sm:$0xf]
  %v82 = vld [vmem:[%s1 + $0x2c] sm:$0xf]
  %v83 = vld [vmem:[%s1 + $0x30] sm:$0xf]
  %v84 = vld [vmem:[%s1 + $0x34] sm:$0xf]
  %v85 = vld [vmem:[%s1 + $0x38] sm:$0xf]
  %v86 = vld [vmem:[%s1 + $0x3c] sm:$0xf]
  %v103 = vunpack.c.l.b16 %v55
  %v104 = vunpack.c.l.b16 %v56
  %v105 = vunpack.c.l.b16 %v57
  %v106 = vunpack.c.l.b16 %v58
  %v107 = vunpack.c.l.b16 %v59
  %v108 = vunpack.c.l.b16 %v60
  %v109 = vunpack.c.l.b16 %v61
  %v110 = vunpack.c.l.b16 %v62
  %v111 = vunpack.c.l.b16 %v63
  %v112 = vunpack.c.l.b16 %v64
  %v113 = vunpack.c.l.b16 %v65
  %v114 = vunpack.c.l.b16 %v66
  %v115 = vunpack.c.l.b16 %v67
  %v116 = vunpack.c.l.b16 %v68
  %v117 = vunpack.c.l.b16 %v69
  %v118 = vunpack.c.l.b16 %v70
  %v119 = vpack.c.b16 %v104, %v103
  %v120 = vpack.c.b16 %v106, %v105
  %v121 = vpack.c.b16 %v108, %v107
  %v122 = vpack.c.b16 %v110, %v109
  %v123 = vpack.c.b16 %v112, %v111
  %v124 = vpack.c.b16 %v114, %v113
  %v125 = vpack.c.b16 %v116, %v115
  %v126 = vpack.c.b16 %v118, %v117
  %v151 = vunpack.c.l.b16 %v71
  %v152 = vunpack.c.l.b16 %v72
  %v153 = vunpack.c.l.b16 %v73
  %v154 = vunpack.c.l.b16 %v74
  %v155 = vunpack.c.l.b16 %v75
  %v156 = vunpack.c.l.b16 %v76
  %v157 = vunpack.c.l.b16 %v77
  %v158 = vunpack.c.l.b16 %v78
  %v159 = vunpack.c.l.b16 %v79
  %v160 = vunpack.c.l.b16 %v80
  %v161 = vunpack.c.l.b16 %v81
  %v162 = vunpack.c.l.b16 %v82
  %v163 = vunpack.c.l.b16 %v83
  %v164 = vunpack.c.l.b16 %v84
  %v165 = vunpack.c.l.b16 %v85
  %v166 = vunpack.c.l.b16 %v86
  %v167 = vpack.c.b16 %v152, %v151
  %v168 = vpack.c.b16 %v154, %v153
  %v169 = vpack.c.b16 %v156, %v155
  %v170 = vpack.c.b16 %v158, %v157
  %v171 = vpack.c.b16 %v160, %v159
  %v172 = vpack.c.b16 %v162, %v161
  %v173 = vpack.c.b16 %v164, %v163
  %v174 = vpack.c.b16 %v166, %v165
  %183 = vmatprep.subr.bf16.mxu0 0
  %184 = vmatpush1.bf16.msra.mxu0 %v167
  %185 = vmatprep.subr.bf16.mxu0 0
  %186 = vmatpush1.bf16.msra.mxu0 %v168
  %187 = vmatprep.subr.bf16.mxu0 0
  %188 = vmatpush1.bf16.msra.mxu0 %v169
  %189 = vmatprep.subr.bf16.mxu0 0
  %190 = vmatpush1.bf16.msra.mxu0 %v170
  %191 = vmatprep.subr.bf16.mxu0 0
  %192 = vmatpush1.bf16.msra.mxu0 %v171
  %193 = vmatprep.subr.bf16.mxu0 0
  %194 = vmatpush1.bf16.msra.mxu0 %v172
  %195 = vmatprep.subr.bf16.mxu0 0
  %196 = vmatpush1.bf16.msra.mxu0 %v173
  %197 = vmatprep.subr.bf16.mxu0 0
  %198 = vmatpush1.bf16.msra.mxu0 %v174
  %199 = vmatprep.subr.bf16.mxu0 0
  %200 = vmatpush1.bf16.msra.mxu0 0
  %201 = vmatprep.subr.bf16.mxu0 0
  %202 = vmatpush1.bf16.msra.mxu0 0
  %203 = vmatprep.subr.bf16.mxu0 0
  %204 = vmatpush1.bf16.msra.mxu0 0
  %205 = vmatprep.subr.bf16.mxu0 0
  %206 = vmatpush1.bf16.msra.mxu0 0
  %207 = vmatprep.subr.bf16.mxu0 0
  %208 = vmatpush1.bf16.msra.mxu0 0
  %209 = vmatprep.subr.bf16.mxu0 0
  %210 = vmatpush1.bf16.msra.mxu0 0
  %211 = vmatprep.subr.bf16.mxu0 0
  %212 = vmatpush1.bf16.msra.mxu0 0
  %213 = vmatprep.subr.bf16.mxu0 0
  %214 = vmatpush1.bf16.msra.mxu0 0
  %215 = vmatprep.mubr.bf16.mxu0 0
  %216 = vmatmul.mubr.bf16.gmra.mrb[0].mxu0 %v119
  %v217 = vpop.f32.mrb[0].mxu0
  %v218 = vadd.f32 0.0, %v217
  %v219 = vpop.f32.mrb[0].mxu0
  %v220 = vpop.f32.mrb[0].mxu0
  %v221 = vadd.f32 0.0, %v220
  %v222 = vpop.f32.mrb[0].mxu0
  %223 = vmatprep.mubr.bf16.mxu0 0
  %224 = vmatmul.mubr.bf16.gmra.mrb[0].mxu0 %v120
  %v225 = vpop.f32.mrb[0].mxu0
  %v226 = vadd.f32 0.0, %v225
  %v227 = vpop.f32.mrb[0].mxu0
  %v228 = vpop.f32.mrb[0].mxu0
  %v229 = vadd.f32 0.0, %v228
  %v230 = vpop.f32.mrb[0].mxu0
  %231 = vmatprep.mubr.bf16.mxu0 0
  %232 = vmatmul.mubr.bf16.gmra.mrb[0].mxu0 %v121
  %v233 = vpop.f32.mrb[0].mxu0
  %v234 = vadd.f32 0.0, %v233
  %v235 = vpop.f32.mrb[0].mxu0
  %v236 = vpop.f32.mrb[0].mxu0
  %v237 = vadd.f32 0.0, %v236
  %v238 = vpop.f32.mrb[0].mxu0
  %239 = vmatprep.mubr.bf16.mxu0 0
  %240 = vmatmul.mubr.bf16.gmra.mrb[0].mxu0 %v122
  %v241 = vpop.f32.mrb[0].mxu0
  %v242 = vadd.f32 0.0, %v241
  %v243 = vpop.f32.mrb[0].mxu0
  %v244 = vpop.f32.mrb[0].mxu0
  %v245 = vadd.f32 0.0, %v244
  %v246 = vpop.f32.mrb[0].mxu0
  %247 = vmatprep.mubr.bf16.mxu0 0
  %248 = vmatmul.mubr.bf16.gmra.mrb[0].mxu0 %v123
  %v249 = vpop.f32.mrb[0].mxu0
  %v250 = vadd.f32 0.0, %v249
  %v251 = vpop.f32.mrb[0].mxu0
  %v252 = vpop.f32.mrb[0].mxu0
  %v253 = vadd.f32 0.0, %v252
  %v254 = vpop.f32.mrb[0].mxu0
  %255 = vmatprep.mubr.bf16.mxu0 0
  %256 = vmatmul.mubr.bf16.gmra.mrb[0].mxu0 %v124
  %v257 = vpop.f32.mrb[0].mxu0
  %v258 = vadd.f32 0.0, %v257
  %v259 = vpop.f32.mrb[0].mxu0
  %v260 = vpop.f32.mrb[0].mxu0
  %v261 = vadd.f32 0.0, %v260
  %v262 = vpop.f32.mrb[0].mxu0
  %263 = vmatprep.mubr.bf16.mxu0 0
  %264 = vmatmul.mubr.bf16.gmra.mrb[0].mxu0 %v125
  %v265 = vpop.f32.mrb[0].mxu0
  %v266 = vadd.f32 0.0, %v265
  %v267 = vpop.f32.mrb[0].mxu0
  %v268 = vpop.f32.mrb[0].mxu0
  %v269 = vadd.f32 0.0, %v268
  %v270 = vpop.f32.mrb[0].mxu0
  %271 = vmatprep.mubr.bf16.mxu0 0
  %272 = vmatmul.mubr.bf16.gmra.mrb[0].mxu0 %v126
  %v273 = vpop.f32.mrb[0].mxu0
  %v274 = vadd.f32 0.0, %v273
  %v275 = vpop.f32.mrb[0].mxu0
  %v276 = vpop.f32.mrb[0].mxu0
  %v277 = vadd.f32 0.0, %v276
  %v278 = vpop.f32.mrb[0].mxu0
  %279 = vdwg.mxu0
  %v280 = vadd.f32 %v39, %v218
  %v281 = vadd.f32 %v40, %v221
  %v282 = vadd.f32 %v41, %v226
  %v283 = vadd.f32 %v42, %v229
  %v284 = vadd.f32 %v43, %v234
  %v285 = vadd.f32 %v44, %v237
  %v286 = vadd.f32 %v45, %v242
  %v287 = vadd.f32 %v46, %v245
  %v288 = vadd.f32 %v47, %v250
  %v289 = vadd.f32 %v48, %v253
  %v290 = vadd.f32 %v49, %v258
  %v291 = vadd.f32 %v50, %v261
  %v292 = vadd.f32 %v51, %v266
  %v293 = vadd.f32 %v52, %v269
  %v294 = vadd.f32 %v53, %v274
  %v295 = vadd.f32 %v54, %v277
  %vm296 = vcmask 261120
  %297 = vst.msk [vmem:[#allocation2] sm:$0xff] %vm296, %v280
  %298 = vst.msk [vmem:[#allocation2 + $0x8] sm:$0xff] %vm296, %v281
  %299 = vst.msk [vmem:[#allocation2 + $0x10] sm:$0xff] %vm296, %v282
  %300 = vst.msk [vmem:[#allocation2 + $0x18] sm:$0xff] %vm296, %v283
  %301 = vst.msk [vmem:[#allocation2 + $0x20] sm:$0xff] %vm296, %v284
  %302 = vst.msk [vmem:[#allocation2 + $0x28] sm:$0xff] %vm296, %v285
  %303 = vst.msk [vmem:[#allocation2 + $0x30] sm:$0xff] %vm296, %v286
  %304 = vst.msk [vmem:[#allocation2 + $0x38] sm:$0xff] %vm296, %v287
  %305 = vst.msk [vmem:[#allocation2 + $0x40] sm:$0xff] %vm296, %v288
  %306 = vst.msk [vmem:[#allocation2 + $0x48] sm:$0xff] %vm296, %v289
  %307 = vst.msk [vmem:[#allocation2 + $0x50] sm:$0xff] %vm296, %v290
  %308 = vst.msk [vmem:[#allocation2 + $0x58] sm:$0xff] %vm296, %v291
  %309 = vst.msk [vmem:[#allocation2 + $0x60] sm:$0xff] %vm296, %v292
  %310 = vst.msk [vmem:[#allocation2 + $0x68] sm:$0xff] %vm296, %v293
  %311 = vst.msk [vmem:[#allocation2 + $0x70] sm:$0xff] %vm296, %v294
  %312 = vst.msk [vmem:[#allocation2 + $0x78] sm:$0xff] %vm296, %v295
  // Predicated region
  $region22: #{tpu_custom_call.1} parent=0 // pred_check
    %p313 = pneg %p18
  $region23: #{tpu_custom_call.1} parent=0 // pred_check_branch
    %315 = sbr.rel (%p313) target = $region25
  $region24: #{tpu_custom_call.1} parent=0 // pred_region
    %v316 = vld [vmem:[#allocation2] sm:$0xff]
    %v317 = vld [vmem:[#allocation2 + $0x8] sm:$0xff]
    %v318 = vld [vmem:[#allocation2 + $0x10] sm:$0xff]
    %v319 = vld [vmem:[#allocation2 + $0x18] sm:$0xff]
    %v320 = vld [vmem:[#allocation2 + $0x20] sm:$0xff]
    %v321 = vld [vmem:[#allocation2 + $0x28] sm:$0xff]
    %v322 = vld [vmem:[#allocation2 + $0x30] sm:$0xff]
    %v323 = vld [vmem:[#allocation2 + $0x38] sm:$0xff]
    %v324 = vld [vmem:[#allocation2 + $0x40] sm:$0xff]
    %v325 = vld [vmem:[#allocation2 + $0x48] sm:$0xff]
    %v326 = vld [vmem:[#allocation2 + $0x50] sm:$0xff]
    %v327 = vld [vmem:[#allocation2 + $0x58] sm:$0xff]
    %v328 = vld [vmem:[#allocation2 + $0x60] sm:$0xff]
    %v329 = vld [vmem:[#allocation2 + $0x68] sm:$0xff]
    %v330 = vld [vmem:[#allocation2 + $0x70] sm:$0xff]
    %v331 = vld [vmem:[#allocation2 + $0x78] sm:$0xff]
    %v332 = vld [vmem:[%s2] sm:$0x1]
    %v334 = vlaneseq
    %v335 = vshrl.u32 %v334, 7
    %v336 = vsub.s32 0, %v335
    %v337 = vrot.slane %v332, %v336
    %v339 = vadd.f32 %v316, %v337
    %v340 = vadd.f32 %v317, %v337
    %v341 = vadd.f32 %v318, %v337
    %v342 = vadd.f32 %v319, %v337
    %v343 = vadd.f32 %v320, %v337
    %v344 = vadd.f32 %v321, %v337
    %v345 = vadd.f32 %v322, %v337
    %v346 = vadd.f32 %v323, %v337
    %v347 = vadd.f32 %v324, %v337
    %v348 = vadd.f32 %v325, %v337
    %v349 = vadd.f32 %v326, %v337
    %v350 = vadd.f32 %v327, %v337
    %v351 = vadd.f32 %v328, %v337
    %v352 = vadd.f32 %v329, %v337
    %v353 = vadd.f32 %v330, %v337
    %v354 = vadd.f32 %v331, %v337
    %v355 = vmax.f32 %v339, 0.0
    %v356 = vmax.f32 %v340, 0.0
    %v357 = vmax.f32 %v341, 0.0
    %v358 = vmax.f32 %v342, 0.0
    %v359 = vmax.f32 %v343, 0.0
    %v360 = vmax.f32 %v344, 0.0
    %v361 = vmax.f32 %v345, 0.0
    %v362 = vmax.f32 %v346, 0.0
    %v363 = vmax.f32 %v347, 0.0
    %v364 = vmax.f32 %v348, 0.0
    %v365 = vmax.f32 %v349, 0.0
    %v366 = vmax.f32 %v350, 0.0
    %v367 = vmax.f32 %v351, 0.0
    %v368 = vmax.f32 %v352, 0.0
    %v369 = vmax.f32 %v353, 0.0
    %v370 = vmax.f32 %v354, 0.0
    %v371 = vld [vmem:[%s3] sm:$0xf]
    %v372 = vld [vmem:[%s3 + $0x4] sm:$0xf]
    %v373 = vld [vmem:[%s3 + $0x8] sm:$0xf]
    %v374 = vld [vmem:[%s3 + $0xc] sm:$0xf]
    %v375 = vld [vmem:[%s3 + $0x10] sm:$0xf]
    %v376 = vld [vmem:[%s3 + $0x14] sm:$0xf]
    %v377 = vld [vmem:[%s3 + $0x18] sm:$0xf]
    %v378 = vld [vmem:[%s3 + $0x1c] sm:$0xf]
    %v379 = vld [vmem:[%s3 + $0x20] sm:$0xf]
    %v380 = vld [vmem:[%s3 + $0x24] sm:$0xf]
    %v381 = vld [vmem:[%s3 + $0x28] sm:$0xf]
    %v382 = vld [vmem:[%s3 + $0x2c] sm:$0xf]
    %v383 = vld [vmem:[%s3 + $0x30] sm:$0xf]
    %v384 = vld [vmem:[%s3 + $0x34] sm:$0xf]
    %v385 = vld [vmem:[%s3 + $0x38] sm:$0xf]
    %v386 = vld [vmem:[%s3 + $0x3c] sm:$0xf]
    %v387 = vunpack.c.l.bf16 %v371
    %v388 = vunpack.c.l.bf16 %v372
    %v389 = vunpack.c.l.bf16 %v373
    %v390 = vunpack.c.l.bf16 %v374
    %v391 = vunpack.c.l.bf16 %v375
    %v392 = vunpack.c.l.bf16 %v376
    %v393 = vunpack.c.l.bf16 %v377
    %v394 = vunpack.c.l.bf16 %v378
    %v395 = vunpack.c.l.bf16 %v379
    %v396 = vunpack.c.l.bf16 %v380
    %v397 = vunpack.c.l.bf16 %v381
    %v398 = vunpack.c.l.bf16 %v382
    %v399 = vunpack.c.l.bf16 %v383
    %v400 = vunpack.c.l.bf16 %v384
    %v401 = vunpack.c.l.bf16 %v385
    %v402 = vunpack.c.l.bf16 %v386
    %v403 = vmul.f32 %v355, %v387
    %v404 = vmul.f32 %v356, %v388
    %v405 = vmul.f32 %v357, %v389
    %v406 = vmul.f32 %v358, %v390
    %v407 = vmul.f32 %v359, %v391
    %v408 = vmul.f32 %v360, %v392
    %v409 = vmul.f32 %v361, %v393
    %v410 = vmul.f32 %v362, %v394
    %v411 = vmul.f32 %v363, %v395
    %v412 = vmul.f32 %v364, %v396
    %v413 = vmul.f32 %v365, %v397
    %v414 = vmul.f32 %v366, %v398
    %v415 = vmul.f32 %v367, %v399
    %v416 = vmul.f32 %v368, %v400
    %v417 = vmul.f32 %v369, %v401
    %v418 = vmul.f32 %v370, %v402
    %v419 = vpack.c.bf16 %v404, %v403
    %v420 = vpack.c.bf16 %v406, %v405
    %v421 = vpack.c.bf16 %v408, %v407
    %v422 = vpack.c.bf16 %v410, %v409
    %v423 = vpack.c.bf16 %v412, %v411
    %v424 = vpack.c.bf16 %v414, %v413
    %v425 = vpack.c.bf16 %v416, %v415
    %v426 = vpack.c.bf16 %v418, %v417
    %v435 = vunpack.c.l.b16 %v419
    %v436 = vunpack.c.h.b16 %v419
    %v437 = vunpack.c.l.b16 %v420
    %v438 = vunpack.c.h.b16 %v420
    %v439 = vunpack.c.l.b16 %v421
    %v440 = vunpack.c.h.b16 %v421
    %v441 = vunpack.c.l.b16 %v422
    %v442 = vunpack.c.h.b16 %v422
    %v443 = vunpack.c.l.b16 %v423
    %v444 = vunpack.c.h.b16 %v423
    %v445 = vunpack.c.l.b16 %v424
    %v446 = vunpack.c.h.b16 %v424
    %v447 = vunpack.c.l.b16 %v425
    %v448 = vunpack.c.h.b16 %v425
    %v449 = vunpack.c.l.b16 %v426
    %v450 = vunpack.c.h.b16 %v426
    %v451 = vpack.c.b16 %v435, %v435
    %v452 = vpack.c.b16 %v436, %v436
    %v453 = vpack.c.b16 %v437, %v437
    %v454 = vpack.c.b16 %v438, %v438
    %v455 = vpack.c.b16 %v439, %v439
    %v456 = vpack.c.b16 %v440, %v440
    %v457 = vpack.c.b16 %v441, %v441
    %v458 = vpack.c.b16 %v442, %v442
    %v459 = vpack.c.b16 %v443, %v443
    %v460 = vpack.c.b16 %v444, %v444
    %v461 = vpack.c.b16 %v445, %v445
    %v462 = vpack.c.b16 %v446, %v446
    %v463 = vpack.c.b16 %v447, %v447
    %v464 = vpack.c.b16 %v448, %v448
    %v465 = vpack.c.b16 %v449, %v449
    %v466 = vpack.c.b16 %v450, %v450
    %vm483 = vcmask 257024
    %484 = vst.msk [vmem:[%s4] sm:$0xf] %vm483, %v451
    %485 = vst.msk [vmem:[%s4 + $0x4] sm:$0xf] %vm483, %v452
    %486 = vst.msk [vmem:[%s4 + $0x8] sm:$0xf] %vm483, %v453
    %487 = vst.msk [vmem:[%s4 + $0xc] sm:$0xf] %vm483, %v454
    %488 = vst.msk [vmem:[%s4 + $0x10] sm:$0xf] %vm483, %v455
    %489 = vst.msk [vmem:[%s4 + $0x14] sm:$0xf] %vm483, %v456
    %490 = vst.msk [vmem:[%s4 + $0x18] sm:$0xf] %vm483, %v457
    %491 = vst.msk [vmem:[%s4 + $0x1c] sm:$0xf] %vm483, %v458
    %492 = vst.msk [vmem:[%s4 + $0x20] sm:$0xf] %vm483, %v459
    %493 = vst.msk [vmem:[%s4 + $0x24] sm:$0xf] %vm483, %v460
    %494 = vst.msk [vmem:[%s4 + $0x28] sm:$0xf] %vm483, %v461
    %495 = vst.msk [vmem:[%s4 + $0x2c] sm:$0xf] %vm483, %v462
    %496 = vst.msk [vmem:[%s4 + $0x30] sm:$0xf] %vm483, %v463
    %497 = vst.msk [vmem:[%s4 + $0x34] sm:$0xf] %vm483, %v464
    %498 = vst.msk [vmem:[%s4 + $0x38] sm:$0xf] %vm483, %v465
    %499 = vst.msk [vmem:[%s4 + $0x3c] sm:$0xf] %vm483, %v466
  $region25: #{tpu_custom_call.1} parent=0 // pred_fallthru
    _
  // Predicated region
  $region26: #{tpu_custom_call.1} parent=0 // pred_check
    _
  $region27: #{tpu_custom_call.1} parent=0 // pred_check_branch
    %501 = sbr.rel (0) target = $region29
  $region28: #{tpu_custom_call.1} parent=0 // pred_region
    _
  $region29: #{tpu_custom_call.1} parent=0 // pred_fallthru
    _
  // Predicated region
  $region30: #{tpu_custom_call.1} parent=0 // pred_check
    _
  $region31: #{tpu_custom_call.1} parent=0 // pred_check_branch
    %503 = sbr.rel (0) target = $region33
  $region32: #{tpu_custom_call.1} parent=0 // pred_region
    _
  $region33: #{tpu_custom_call.1} parent=0 // pred_fallthru
    _

</llo_original>
